<compile_context>
chip_gen: v5e
topology: v5e:2x2
jax: 0.10.0
libtpu: 0.0.40
codegen_flags: <defaults>
</compile_context>

<pallas_src>
import jax
import jax.numpy as jnp
from jax import lax
from jax.experimental import pallas as pl
from jax.experimental.pallas import tpu as pltpu

IN_FEATURES = 12
H1 = 64
H2 = 32
OUT = 5

MAX_TB = 4096            # per-step footprint ~2 MiB at 4096 — safe on v5e/v6e/v7x
_STEP_OVERHEAD_COLS = 768  # ~0.35 us fixed per grid step, expressed in batch columns


def _round_up(n, m):
    return ((n + m - 1) // m) * m


def _pick_tb(batch, max_tb=MAX_TB):
    """Pick the batch tile (multiple of 128): minimize steps*(overhead + tb) and keep
    >=2 grid steps once there is enough work so v7x's two TensorCores both get fed."""
    b128 = _round_up(max(batch, 1), 128)
    cap = min(max_tb, b128)
    if b128 >= 256:
        cap = min(cap, max(128, (b128 // 2) // 128 * 128))
    best_tb, best_cost = 128, None
    for cand in (4096, 2048, 1024, 512, 256, 128):
        if cand > cap:
            continue
        steps = -(-b128 // cand)
        cost = steps * (_STEP_OVERHEAD_COLS + cand)
        if best_cost is None or cost < best_cost:
            best_tb, best_cost = cand, cost
    return best_tb


def mlp_kernel(x_ref, w1_ref, b1_ref, w2_ref, b2_ref, w3_ref, b3_ref, o_ref):
    # Per grid step:
    #   x_ref [TB, 12] (native row-major tile)      w1 [64,12] b1 [64,1]
    #   h1    [64, TB] f32                          w2 [32,64] b2 [32,1]
    #   h2    [32, TB] f32                          w3 [ 5,32] b3 [ 5,1]
    #   o_ref [ 5, TB] f32 (lane-dense store)
    x = x_ref[...]
    # Layer 1: W1 @ X^T via transposed-RHS dot (contract feature dim of both) —
    # batch stays on the MXU N / lane axis, no separate transpose pass.
    h1 = lax.dot_general(w1_ref[...], x, (((1,), (1,)), ((), ())),
                         preferred_element_type=jnp.float32)            # [64, TB]
    h1 = jnp.maximum(h1 + b1_ref[...], 0.0)                             # f32 bias+ReLU
    h2 = jnp.dot(w2_ref[...], h1, preferred_element_type=jnp.float32)   # [32, TB]
    h2 = jnp.maximum(h2 + b2_ref[...], 0.0)
    o = jnp.dot(w3_ref[...], h2, preferred_element_type=jnp.float32)    # [ 5, TB]
    o_ref[...] = o + b3_ref[...]


def simple_nn_forward(x, params, *, tb=None, x_dtype=jnp.bfloat16):
    """x: [B, 12] (PyTorch layout). params in torch layout (W [out,in], b [out,1]).
    Returns [B, 5] float32 logits (forward() applies no softmax).
    x_dtype=bf16 (default) halves the dominant HBM read; accumulation is f32."""
    w1, b1, w2, b2, w3, b3 = params
    B = x.shape[0]
    assert x.shape[1] == IN_FEATURES

    tb = _pick_tb(B) if tb is None else max(128, _round_up(int(tb), 128))
    num_blocks = pl.cdiv(B, tb)
    b_pad = num_blocks * tb  # output allocated padded (no extra HBM pass), sliced below

    x_in = x.astype(x_dtype)                 # only traffic-relevant cast (no-op if already x_dtype)
    w1c = w1.astype(x_dtype)                 # tiny; keeps matmul 1 homogeneous on the MXU
    w2c = w2.astype(jnp.float32)
    w3c = w3.astype(jnp.float32)
    b1c, b2c, b3c = (b.astype(jnp.float32) for b in (b1, b2, b3))

    def resident(shape):  # weights/biases: constant index_map -> stay in VMEM across steps
        return pl.BlockSpec(shape, lambda i: (0, 0))

    out_fm = pl.pallas_call(
        mlp_kernel,
        out_shape=jax.ShapeDtypeStruct((OUT, b_pad), jnp.float32),
        grid=(num_blocks,),
        in_specs=[
            pl.BlockSpec((tb, IN_FEATURES), lambda i: (i, 0)),  # x tile, pipelined (ragged tail masked)
            resident((H1, IN_FEATURES)), resident((H1, 1)),
            resident((H2, H1)),          resident((H2, 1)),
            resident((OUT, H2)),         resident((OUT, 1)),
        ],
        out_specs=pl.BlockSpec((OUT, tb), lambda i: (0, i)),
        compiler_params=pltpu.CompilerParams(
            dimension_semantics=("parallel",)),                 # v7x: shard batch axis across 2 TCs
    )(x_in, w1c, b1c, w2c, b2c, w3c, b3c)

    return out_fm[:, :B].T  # back to [B, OUT]


def init_params(key):
    """Deterministic init mimicking torch.nn.Linear default U[-1/sqrt(fan_in), +1/sqrt(fan_in)].
    Weights in torch's [out, in] layout; biases as [out, 1] for feature-major broadcast."""
    ks = jax.random.split(key, 6)

    def lin(kw, kb, fan_in, fan_out):
        bound = 1.0 / jnp.sqrt(float(fan_in))
        w = jax.random.uniform(kw, (fan_out, fan_in), jnp.float32, -bound, bound)
        b = jax.random.uniform(kb, (fan_out, 1), jnp.float32, -bound, bound)
        return w, b

    w1, b1 = lin(ks[0], ks[1], IN_FEATURES, H1)
    w2, b2 = lin(ks[2], ks[3], H1, H2)
    w3, b3 = lin(ks[4], ks[5], H2, OUT)
    return (w1, b1, w2, b2, w3, b3)


def reference_forward(x, params):
    w1, b1, w2, b2, w3, b3 = params
    h1 = jnp.maximum(x @ w1.T + b1.T, 0.0)
    h2 = jnp.maximum(h1 @ w2.T + b2.T, 0.0)
    return h2 @ w3.T + b3.T


if __name__ == "__main__":
    key = jax.random.PRNGKey(0)
    k_params, k_x = jax.random.split(key)
    params = init_params(k_params)

    B = 8
    x = jax.random.normal(k_x, (B, IN_FEATURES), jnp.float32)
    ref = reference_forward(x, params)

    # Exact-parity path (f32 end-to-end) — matches the PyTorch forward numerics.
    out_f32 = jax.block_until_ready(simple_nn_forward(x, params, x_dtype=jnp.float32))
    assert out_f32.shape == (B, OUT)
    assert jnp.allclose(out_f32, ref, atol=1e-5, rtol=1e-5)

    # Default path: bf16 x / w1 (halves dominant HBM read), f32 everywhere else.
    out_bf16 = jax.block_until_ready(simple_nn_forward(x, params))
    assert out_bf16.shape == (B, OUT)
    assert jnp.allclose(out_bf16, ref, atol=5e-2, rtol=5e-2)

    # Ragged multi-step grid (3 steps, last block partial): exercises weight residency,
    # pipelining, and masked edge handling with no wrapper-side padding pass.
    B2 = 300
    x2 = jax.random.normal(jax.random.PRNGKey(1), (B2, IN_FEATURES), jnp.float32)
    out2 = jax.block_until_ready(simple_nn_forward(x2, params, x_dtype=jnp.float32))
    assert out2.shape == (B2, OUT)
    assert jnp.allclose(out2, reference_forward(x2, params), atol=1e-5, rtol=1e-5)

    print("KERNEL_OK")
</pallas_src>

<mosaic_0001>
module attributes {stable_mosaic.version = 11 : i64} {
  func.func @mlp_kernel(%arg0: i32, %arg1: memref<128x12xf32, #tpu.memory_space<vmem>>, %arg2: memref<64x12xf32, #tpu.memory_space<vmem>>, %arg3: memref<64x1xf32, #tpu.memory_space<vmem>>, %arg4: memref<32x64xf32, #tpu.memory_space<vmem>>, %arg5: memref<32x1xf32, #tpu.memory_space<vmem>>, %arg6: memref<5x32xf32, #tpu.memory_space<vmem>>, %arg7: memref<5x1xf32, #tpu.memory_space<vmem>>, %arg8: memref<5x128xf32, #tpu.memory_space<vmem>>) attributes {dimension_semantics = [#tpu.dimension_semantics<parallel>], iteration_bounds = array<i64: 1>, scalar_prefetch = 0 : i64, scratch_operands = 0 : i64, tpu.core_type = #tpu.core_type<tc>, window_params = [{transform_indices = @transform_0, window_bounds = array<i64: 128, 12>}, {pipeline_mode = #tpu.pipeline_mode<synchronous>, transform_indices = @transform_1, window_bounds = array<i64: 64, 12>}, {pipeline_mode = #tpu.pipeline_mode<synchronous>, transform_indices = @transform_2, window_bounds = array<i64: 64, 1>}, {pipeline_mode = #tpu.pipeline_mode<synchronous>, transform_indices = @transform_3, window_bounds = array<i64: 32, 64>}, {pipeline_mode = #tpu.pipeline_mode<synchronous>, transform_indices = @transform_4, window_bounds = array<i64: 32, 1>}, {pipeline_mode = #tpu.pipeline_mode<synchronous>, transform_indices = @transform_5, window_bounds = array<i64: 5, 32>}, {pipeline_mode = #tpu.pipeline_mode<synchronous>, transform_indices = @transform_6, window_bounds = array<i64: 5, 1>}, {transform_indices = @transform_7, window_bounds = array<i64: 5, 128>}]} {
    %c0 = arith.constant 0 : index
    %c0_0 = arith.constant 0 : index
    %0 = vector.load %arg1[%c0, %c0_0] : memref<128x12xf32, #tpu.memory_space<vmem>>, vector<128x12xf32>
    %c0_1 = arith.constant 0 : index
    %c0_2 = arith.constant 0 : index
    %1 = vector.load %arg2[%c0_1, %c0_2] : memref<64x12xf32, #tpu.memory_space<vmem>>, vector<64x12xf32>
    %cst = arith.constant dense<0.000000e+00> : vector<64x128xf32>
    %2 = tpu.matmul %1, %0, %cst {dimension_numbers = #tpu.dot_dimension_numbers<[1], [1], [0], [0], [0, 0, 1, 0], [], []>} : vector<64x12xf32>, vector<128x12xf32>, vector<64x128xf32> -> vector<64x128xf32>
    %c0_3 = arith.constant 0 : index
    %c0_4 = arith.constant 0 : index
    %3 = vector.load %arg3[%c0_3, %c0_4] : memref<64x1xf32, #tpu.memory_space<vmem>>, vector<64x1xf32>
    %4 = vector.broadcast %3 : vector<64x1xf32> to vector<64x128xf32>
    %5 = arith.addf %2, %4 : vector<64x128xf32>
    %cst_5 = arith.constant 0.000000e+00 : f32
    %6 = vector.broadcast %cst_5 : f32 to vector<64x128xf32>
    %7 = arith.maximumf %5, %6 : vector<64x128xf32>
    %c0_6 = arith.constant 0 : index
    %c0_7 = arith.constant 0 : index
    %8 = vector.load %arg4[%c0_6, %c0_7] : memref<32x64xf32, #tpu.memory_space<vmem>>, vector<32x64xf32>
    %cst_8 = arith.constant dense<0.000000e+00> : vector<32x128xf32>
    %9 = tpu.matmul %8, %7, %cst_8 {dimension_numbers = #tpu.dot_dimension_numbers<[1], [0], [0], [1], [0, 0, 1, 1], [], []>} : vector<32x64xf32>, vector<64x128xf32>, vector<32x128xf32> -> vector<32x128xf32>
    %c0_9 = arith.constant 0 : index
    %c0_10 = arith.constant 0 : index
    %10 = vector.load %arg5[%c0_9, %c0_10] : memref<32x1xf32, #tpu.memory_space<vmem>>, vector<32x1xf32>
    %11 = vector.broadcast %10 : vector<32x1xf32> to vector<32x128xf32>
    %12 = arith.addf %9, %11 : vector<32x128xf32>
    %cst_11 = arith.constant 0.000000e+00 : f32
    %13 = vector.broadcast %cst_11 : f32 to vector<32x128xf32>
    %14 = arith.maximumf %12, %13 : vector<32x128xf32>
    %c0_12 = arith.constant 0 : index
    %c0_13 = arith.constant 0 : index
    %15 = vector.load %arg6[%c0_12, %c0_13] : memref<5x32xf32, #tpu.memory_space<vmem>>, vector<5x32xf32>
    %cst_14 = arith.constant dense<0.000000e+00> : vector<5x128xf32>
    %16 = tpu.matmul %15, %14, %cst_14 {dimension_numbers = #tpu.dot_dimension_numbers<[1], [0], [0], [1], [0, 0, 1, 1], [], []>} : vector<5x32xf32>, vector<32x128xf32>, vector<5x128xf32> -> vector<5x128xf32>
    %c0_15 = arith.constant 0 : index
    %c0_16 = arith.constant 0 : index
    %17 = vector.load %arg7[%c0_15, %c0_16] : memref<5x1xf32, #tpu.memory_space<vmem>>, vector<5x1xf32>
    %18 = vector.broadcast %17 : vector<5x1xf32> to vector<5x128xf32>
    %19 = arith.addf %16, %18 : vector<5x128xf32>
    %c0_17 = arith.constant 0 : index
    %c0_18 = arith.constant 0 : index
    %20 = vector.load %arg8[%c0_17, %c0_18] : memref<5x128xf32, #tpu.memory_space<vmem>>, vector<5x128xf32>
    tpu.vector_store %arg8[%c0_17, %c0_18], %19 {strides = array<i32>} : memref<5x128xf32, #tpu.memory_space<vmem>>, vector<5x128xf32>,
    return
  }
  func.func @transform_0(%arg0: i32) -> (i32, i32) {
    %c0_i32 = arith.constant 0 : i32
    %c0_i32_0 = arith.constant 0 : i32
    return %arg0, %c0_i32 : i32, i32
  }
  func.func @transform_1(%arg0: i32) -> (i32, i32) {
    %c0_i32 = arith.constant 0 : i32
    %c0_i32_0 = arith.constant 0 : i32
    %c0_i32_1 = arith.constant 0 : i32
    return %c0_i32, %c0_i32_0 : i32, i32
  }
  func.func @transform_2(%arg0: i32) -> (i32, i32) {
    %c0_i32 = arith.constant 0 : i32
    %c0_i32_0 = arith.constant 0 : i32
    %c0_i32_1 = arith.constant 0 : i32
    return %c0_i32, %c0_i32_0 : i32, i32
  }
  func.func @transform_3(%arg0: i32) -> (i32, i32) {
    %c0_i32 = arith.constant 0 : i32
    %c0_i32_0 = arith.constant 0 : i32
    %c0_i32_1 = arith.constant 0 : i32
    return %c0_i32, %c0_i32_0 : i32, i32
  }
  func.func @transform_4(%arg0: i32) -> (i32, i32) {
    %c0_i32 = arith.constant 0 : i32
    %c0_i32_0 = arith.constant 0 : i32
    %c0_i32_1 = arith.constant 0 : i32
    return %c0_i32, %c0_i32_0 : i32, i32
  }
  func.func @transform_5(%arg0: i32) -> (i32, i32) {
    %c0_i32 = arith.constant 0 : i32
    %c0_i32_0 = arith.constant 0 : i32
    %c0_i32_1 = arith.constant 0 : i32
    return %c0_i32, %c0_i32_0 : i32, i32
  }
  func.func @transform_6(%arg0: i32) -> (i32, i32) {
    %c0_i32 = arith.constant 0 : i32
    %c0_i32_0 = arith.constant 0 : i32
    %c0_i32_1 = arith.constant 0 : i32
    return %c0_i32, %c0_i32_0 : i32, i32
  }
  func.func @transform_7(%arg0: i32) -> (i32, i32) {
    %c0_i32 = arith.constant 0 : i32
    %c0_i32_0 = arith.constant 0 : i32
    return %c0_i32, %arg0 : i32, i32
  }
}

</mosaic_0001>

<llo_original>
// kernel: tpu_custom_call.1
$region0: #{tpu_custom_call.1}
  #allocation0 [shape = 'u32[]', space=smem, size = 0x4, offset = 0x4, fixed_abs, tag = 'smem constant byte address 0x4 - core index']
  #allocation1 [shape = 'u32[72,128]{1,0:T(1,128)}', space=vmem, size = 0x9000, scoped, tag = 'internal scratch']
  %s0 = inlined_call_operand.vmem [shape: f32[8,12], index: 0, kind: input, shape index: {}]
  %s1 = inlined_call_operand.vmem [shape: f32[64,12], index: 1, kind: input, shape index: {}]
  %s2 = inlined_call_operand.vmem [shape: f32[64,1], index: 2, kind: input, shape index: {}]
  %s3 = inlined_call_operand.vmem [shape: f32[32,64], index: 3, kind: input, shape index: {}]
  %s4 = inlined_call_operand.vmem [shape: f32[32,1], index: 4, kind: input, shape index: {}]
  %s5 = inlined_call_operand.vmem [shape: f32[5,32], index: 5, kind: input, shape index: {}]
  %s6 = inlined_call_operand.vmem [shape: f32[5,1], index: 6, kind: input, shape index: {}]
  %s7 = inlined_call_operand.hbm [shape: f32[5,128], index: 7, kind: output, shape index: {}]
  %s8 = sld [smem:[#allocation0]]
  $region38: #{tpu_custom_call.1} parent=0
    _
  %s10 = ssub.s32 1, %s8
  %s11 = scalar_select 0, %s10, %s8
  $region1: #{tpu_custom_call.1} parent=0
    #allocation2 [shape = 'u8[4096]{0}', space=vmem, size = 0x1000, scoped, tag = 'output window, operand 0, single buffered']
    #allocation3 [shape = 's32[1]{0}', space=sflag, size = 0x4, scoped, tag = 'scoped memory for tpu_custom_call.1']
    %12 = vsyncpa [#allocation3], 0
    // Predicated region
    $region2: #{tpu_custom_call.1} parent=1 // pred_check
      _
    $region3: #{tpu_custom_call.1} parent=1 // pred_check_branch
      %14 = sbr.rel (0) target = $region5
    $region4: #{tpu_custom_call.1} parent=1 // pred_region
      _
    $region5: #{tpu_custom_call.1} parent=1 // pred_fallthru
      _
    // Predicated region
    $region6: #{tpu_custom_call.1} parent=1 // pred_check
      _
    $region7: #{tpu_custom_call.1} parent=1 // pred_check_branch
      %16 = sbr.rel (0) target = $region9
    $region8: #{tpu_custom_call.1} parent=1 // pred_region
      _
    $region9: #{tpu_custom_call.1} parent=1 // pred_fallthru
      _
    // Predicated region
    $region10: #{tpu_custom_call.1} parent=1 // pred_check
      _
    $region11: #{tpu_custom_call.1} parent=1 // pred_check_branch
      %18 = sbr.rel (0) target = $region13
    $region12: #{tpu_custom_call.1} parent=1 // pred_region
      _
    $region13: #{tpu_custom_call.1} parent=1 // pred_fallthru
      _
    // Predicated region
    $region14: #{tpu_custom_call.1} parent=1 // pred_check
      _
    $region15: #{tpu_custom_call.1} parent=1 // pred_check_branch
      %20 = sbr.rel (0) target = $region17
    $region16: #{tpu_custom_call.1} parent=1 // pred_region
      _
    $region17: #{tpu_custom_call.1} parent=1 // pred_fallthru
      _
    // Predicated region
    $region18: #{tpu_custom_call.1} parent=1 // pred_check
      _
    $region19: #{tpu_custom_call.1} parent=1 // pred_check_branch
      %22 = sbr.rel (0) target = $region21
    $region20: #{tpu_custom_call.1} parent=1 // pred_region
      _
    $region21: #{tpu_custom_call.1} parent=1 // pred_fallthru
      _
    // Predicated region
    $region22: #{tpu_custom_call.1} parent=1 // pred_check
      _
    $region23: #{tpu_custom_call.1} parent=1 // pred_check_branch
      %24 = sbr.rel (0) target = $region25
    $region24: #{tpu_custom_call.1} parent=1 // pred_region
      _
    $region25: #{tpu_custom_call.1} parent=1 // pred_fallthru
      _
    // Predicated region
    $region26: #{tpu_custom_call.1} parent=1 // pred_check
      _
    $region27: #{tpu_custom_call.1} parent=1 // pred_check_branch
      %26 = sbr.rel (0) target = $region29
    $region28: #{tpu_custom_call.1} parent=1 // pred_region
      _
    $region29: #{tpu_custom_call.1} parent=1 // pred_fallthru
      _
    %v27 = vld [vmem:[%s0] sm:$0xff]
    %v28 = vld [vmem:[%s0 + $0x8] sm:$0xff]
    %v29 = vld [vmem:[%s0 + $0x10] sm:$0xff]
    %v30 = vld [vmem:[%s0 + $0x18] sm:$0xff]
    %v31 = vld [vmem:[%s0 + $0x20] sm:$0xff]
    %v32 = vld [vmem:[%s0 + $0x28] sm:$0xff]
    %v33 = vld [vmem:[%s0 + $0x30] sm:$0xff]
    %v34 = vld [vmem:[%s0 + $0x38] sm:$0xff]
    %v35 = vld [vmem:[%s0 + $0x40] sm:$0xff]
    %v36 = vld [vmem:[%s0 + $0x48] sm:$0xff]
    %v37 = vld [vmem:[%s0 + $0x50] sm:$0xff]
    %v38 = vld [vmem:[%s0 + $0x58] sm:$0xff]
    %v39 = vld [vmem:[%s0 + $0x60] sm:$0xff]
    %v40 = vld [vmem:[%s0 + $0x68] sm:$0xff]
    %v41 = vld [vmem:[%s0 + $0x70] sm:$0xff]
    %v42 = vld [vmem:[%s0 + $0x78] sm:$0xff]
    %v43 = vld [vmem:[%s1] sm:$0xff]
    %v44 = vld [vmem:[%s1 + $0x8] sm:$0xff]
    %v45 = vld [vmem:[%s1 + $0x10] sm:$0xff]
    %v46 = vld [vmem:[%s1 + $0x18] sm:$0xff]
    %v47 = vld [vmem:[%s1 + $0x20] sm:$0xff]
    %v48 = vld [vmem:[%s1 + $0x28] sm:$0xff]
    %v49 = vld [vmem:[%s1 + $0x30] sm:$0xff]
    %v50 = vld [vmem:[%s1 + $0x38] sm:$0xff]
    %v51 = vld [vmem:[%s2] sm:$0xff]
    %v52 = vld [vmem:[%s2 + $0x8] sm:$0xff]
    %v53 = vld [vmem:[%s2 + $0x10] sm:$0xff]
    %v54 = vld [vmem:[%s2 + $0x18] sm:$0xff]
    %v55 = vld [vmem:[%s2 + $0x20] sm:$0xff]
    %v56 = vld [vmem:[%s2 + $0x28] sm:$0xff]
    %v57 = vld [vmem:[%s2 + $0x30] sm:$0xff]
    %v58 = vld [vmem:[%s2 + $0x38] sm:$0xff]
    %60 = vset.pattern.permute.xlu0 0
    %61 = vperm.xlu0 %60, %v51
    %v62 = vpop.permute.xlu0 %61
    %65 = vset.pattern.permute.xlu0 0
    %66 = vperm.xlu0 %65, %v52
    %v67 = vpop.permute.xlu0 %66
    %70 = vset.pattern.permute.xlu0 0
    %71 = vperm.xlu0 %70, %v53
    %v72 = vpop.permute.xlu0 %71
    %75 = vset.pattern.permute.xlu0 0
    %76 = vperm.xlu0 %75, %v54
    %v77 = vpop.permute.xlu0 %76
    %80 = vset.pattern.permute.xlu0 0
    %81 = vperm.xlu0 %80, %v55
    %v82 = vpop.permute.xlu0 %81
    %85 = vset.pattern.permute.xlu0 0
    %86 = vperm.xlu0 %85, %v56
    %v87 = vpop.permute.xlu0 %86
    %90 = vset.pattern.permute.xlu0 0
    %91 = vperm.xlu0 %90, %v57
    %v92 = vpop.permute.xlu0 %91
    %95 = vset.pattern.permute.xlu0 0
    %96 = vperm.xlu0 %95, %v58
    %v97 = vpop.permute.xlu0 %96
    %vm99 = vcmask 97280
    %v101 = vsel %vm99, %v43, 0
    %v104 = vsel %vm99, %v44, 0
    %v107 = vsel %vm99, %v45, 0
    %v110 = vsel %vm99, %v46, 0
    %v113 = vsel %vm99, %v47, 0
    %v116 = vsel %vm99, %v48, 0
    %v119 = vsel %vm99, %v49, 0
    %v122 = vsel %vm99, %v50, 0
    %v125 = vsel %vm99, %v27, 0
    %v128 = vsel %vm99, %v28, 0
    %v131 = vsel %vm99, %v29, 0
    %v134 = vsel %vm99, %v30, 0
    %v137 = vsel %vm99, %v31, 0
    %v140 = vsel %vm99, %v32, 0
    %v143 = vsel %vm99, %v33, 0
    %v146 = vsel %vm99, %v34, 0
    %v149 = vsel %vm99, %v35, 0
    %v152 = vsel %vm99, %v36, 0
    %v155 = vsel %vm99, %v37, 0
    %v158 = vsel %vm99, %v38, 0
    %v161 = vsel %vm99, %v39, 0
    %v164 = vsel %vm99, %v40, 0
    %v167 = vsel %vm99, %v41, 0
    %v170 = vsel %vm99, %v42, 0
    %172 = vmatpush.xpose.msra.mxu0 %v170
    %173 = vmatpush.xpose.msra.mxu0 %v167
    %174 = vmatpush.xpose.msra.mxu0 %v164
    %175 = vmatpush.xpose.msra.mxu0 %v161
    %176 = vmatpush.xpose.msra.mxu0 %v158
    %177 = vmatpush.xpose.msra.mxu0 %v155
    %178 = vmatpush.xpose.msra.mxu0 %v152
    %179 = vmatpush.xpose.msra.mxu0 %v149
    %180 = vmatpush.xpose.msra.mxu0 %v146
    %181 = vmatpush.xpose.msra.mxu0 %v143
    %182 = vmatpush.xpose.msra.mxu0 %v140
    %183 = vmatpush.xpose.msra.mxu0 %v137
    %184 = vmatpush.xpose.msra.mxu0 %v134
    %185 = vmatpush.xpose.msra.mxu0 %v131
    %186 = vmatpush.xpose.msra.mxu0 %v128
    %187 = vmatpush.xpose.msra.mxu0 %v125
    %188 = vmatmul.f32.gmra.mxu0 %v101
    %v189 = vpop.f32.mrf.mxu0
    %v190 = vadd.f32 %v62, %v189
    %191 = vmatmul.f32.gmra.mxu0 %v104
    %v192 = vpop.f32.mrf.mxu0
    %v193 = vadd.f32 %v67, %v192
    %194 = vmatmul.f32.gmra.mxu0 %v107
    %v195 = vpop.f32.mrf.mxu0
    %v196 = vadd.f32 %v72, %v195
    %197 = vmatmul.f32.gmra.mxu0 %v110
    %v198 = vpop.f32.mrf.mxu0
    %v199 = vadd.f32 %v77, %v198
    %200 = vmatmul.f32.gmra.mxu0 %v113
    %v201 = vpop.f32.mrf.mxu0
    %v202 = vadd.f32 %v82, %v201
    %203 = vmatmul.f32.gmra.mxu0 %v116
    %v204 = vpop.f32.mrf.mxu0
    %v205 = vadd.f32 %v87, %v204
    %206 = vmatmul.f32.gmra.mxu0 %v119
    %v207 = vpop.f32.mrf.mxu0
    %v208 = vadd.f32 %v92, %v207
    %209 = vmatmul.f32.gmra.mxu0 %v122
    %v210 = vpop.f32.mrf.mxu0
    %v211 = vadd.f32 %v97, %v210
    %212 = vdwg.mxu0
    %v213 = vmax.f32 %v190, 0.0
    %v214 = vmax.f32 %v193, 0.0
    %v215 = vmax.f32 %v196, 0.0
    %v216 = vmax.f32 %v199, 0.0
    %v217 = vmax.f32 %v202, 0.0
    %v218 = vmax.f32 %v205, 0.0
    %v219 = vmax.f32 %v208, 0.0
    %v220 = vmax.f32 %v211, 0.0
    %v221 = vld [vmem:[%s3] sm:$0xff]
    %v222 = vld [vmem:[%s3 + $0x8] sm:$0xff]
    %v223 = vld [vmem:[%s3 + $0x10] sm:$0xff]
    %v224 = vld [vmem:[%s3 + $0x18] sm:$0xff]
    %v225 = vld [vmem:[%s4] sm:$0xff]
    %v226 = vld [vmem:[%s4 + $0x8] sm:$0xff]
    %v227 = vld [vmem:[%s4 + $0x10] sm:$0xff]
    %v228 = vld [vmem:[%s4 + $0x18] sm:$0xff]
    %230 = vset.pattern.permute.xlu0 0
    %231 = vperm.xlu0 %230, %v225
    %v232 = vpop.permute.xlu0 %231
    %235 = vset.pattern.permute.xlu0 0
    %236 = vperm.xlu0 %235, %v226
    %v237 = vpop.permute.xlu0 %236
    %240 = vset.pattern.permute.xlu0 0
    %241 = vperm.xlu0 %240, %v227
    %v242 = vpop.permute.xlu0 %241
    %245 = vset.pattern.permute.xlu0 0
    %246 = vperm.xlu0 %245, %v228
    %v247 = vpop.permute.xlu0 %246
    %vm249 = vcmask 523264
    %v251 = vsel %vm249, %v221, 0
    %v254 = vsel %vm249, %v222, 0
    %v257 = vsel %vm249, %v223, 0
    %v260 = vsel %vm249, %v224, 0
    %262 = vmatpush.msra.mxu0 0.0
    %263 = vmatpush.msra.mxu0 0.0
    %264 = vmatpush.msra.mxu0 0.0
    %265 = vmatpush.msra.mxu0 0.0
    %266 = vmatpush.msra.mxu0 0.0
    %267 = vmatpush.msra.mxu0 0.0
    %268 = vmatpush.msra.mxu0 0.0
    %269 = vmatpush.msra.mxu0 0.0
    %270 = vmatpush.msra.mxu0 %v220
    %271 = vmatpush.msra.mxu0 %v219
    %272 = vmatpush.msra.mxu0 %v218
    %273 = vmatpush.msra.mxu0 %v217
    %274 = vmatpush.msra.mxu0 %v216
    %275 = vmatpush.msra.mxu0 %v215
    %276 = vmatpush.msra.mxu0 %v214
    %277 = vmatpush.msra.mxu0 %v213
    %278 = vmatmul.f32.gmra.mxu0 %v251
    %v279 = vpop.f32.mrf.mxu0
    %v280 = vadd.f32 %v232, %v279
    %281 = vmatmul.f32.gmra.mxu0 %v254
    %v282 = vpop.f32.mrf.mxu0
    %v283 = vadd.f32 %v237, %v282
    %284 = vmatmul.f32.gmra.mxu0 %v257
    %v285 = vpop.f32.mrf.mxu0
    %v286 = vadd.f32 %v242, %v285
    %287 = vmatmul.f32.gmra.mxu0 %v260
    %v288 = vpop.f32.mrf.mxu0
    %v289 = vadd.f32 %v247, %v288
    %290 = vdwg.mxu0
    %v291 = vmax.f32 %v280, 0.0
    %v292 = vmax.f32 %v283, 0.0
    %v293 = vmax.f32 %v286, 0.0
    %v294 = vmax.f32 %v289, 0.0
    %v295 = vld [vmem:[%s5] sm:$0x1f]
    %v296 = vld [vmem:[%s6] sm:$0x1f]
    %298 = vset.pattern.permute.xlu0 0
    %299 = vperm.xlu0 %298, %v296
    %v300 = vpop.permute.xlu0 %299
    %vm302 = vcmask 261120
    %v304 = vsel %vm302, %v295, 0
    %306 = vmatpush.msra.mxu0 0.0
    %307 = vmatpush.msra.mxu0 0.0
    %308 = vmatpush.msra.mxu0 0.0
    %309 = vmatpush.msra.mxu0 0.0
    %310 = vmatpush.msra.mxu0 0.0
    %311 = vmatpush.msra.mxu0 0.0
    %312 = vmatpush.msra.mxu0 0.0
    %313 = vmatpush.msra.mxu0 0.0
    %314 = vmatpush.msra.mxu0 0.0
    %315 = vmatpush.msra.mxu0 0.0
    %316 = vmatpush.msra.mxu0 0.0
    %317 = vmatpush.msra.mxu0 0.0
    %318 = vmatpush.msra.mxu0 %v294
    %319 = vmatpush.msra.mxu0 %v293
    %320 = vmatpush.msra.mxu0 %v292
    %321 = vmatpush.msra.mxu0 %v291
    %322 = vmatmul.f32.gmra.mxu0 %v304
    %v323 = vpop.f32.mrf.mxu0
    %v324 = vadd.f32 %v300, %v323
    %325 = vdwg.mxu0
    %326 = vst [vmem:[#allocation2] sm:$0x1f] %v324
    // Predicated region
    $region30: #{tpu_custom_call.1} parent=1 // pred_check
      _
    $region31: #{tpu_custom_call.1} parent=1 // pred_check_branch
      %328 = sbr.rel (0) target = $region33
    $region32: #{tpu_custom_call.1} parent=1 // pred_region
      %330 = vsyncadd [#allocation3], 0
      %s332 = sshll.u32 [#allocation2], 4
      %s333 = int_to_ptr.vmem [resolvable:$true] %s332
      %s334 = sshll.u32 %s7, 4
      %s335 = int_to_ptr.hbm [resolvable:$true] %s334
      %337 = dma.vmem_to_hbm [thread:$0]  %s333, 128, %s335, [#allocation3]
    $region33: #{tpu_custom_call.1} parent=1 // pred_fallthru
      _
    // Predicated region
    $region34: #{tpu_custom_call.1} parent=1 // pred_check
      _
    $region35: #{tpu_custom_call.1} parent=1 // pred_check_branch
      %339 = sbr.rel (0) target = $region37
    $region36: #{tpu_custom_call.1} parent=1 // pred_region
      %341 = dma.done [#allocation3], 128
    $region37: #{tpu_custom_call.1} parent=1 // pred_fallthru
      _
    %342 = vsyncpa [#allocation3], 1

</llo_original>
